<compile_context>
chip_gen: v6e
topology: v6e:2x2x1
jax: 0.10.0
libtpu: 0.0.40
codegen_flags: <defaults>
</compile_context>

<pallas_src>
import functools

import jax
import jax.numpy as jnp
from jax.experimental import pallas as pl
from jax.experimental.pallas import tpu as pltpu

SELU_ALPHA = 1.6732632423543772
SELU_SCALE = 1.0507009873554805
_LANE = 128
_SUBLANE = 8


def _round_up(x, m):
    return ((x + m - 1) // m) * m


def _selu(x):
    # exp only on the non-positive branch value -> no inf/NaN risk if this ever
    # gets differentiated.
    neg = SELU_ALPHA * (jnp.exp(jnp.minimum(x, 0.0)) - 1.0)
    return SELU_SCALE * jnp.where(x > 0.0, x, neg)


def _fnn_policy_kernel(n_layers, state_size, x_ref, w_ref, b_ref, o_ref):
    """x_ref: (TB, state_size) f32 activations (unpadded lanes);
    w_ref: (L, DPAD, DPAD) in (in, out) layout, zero-padded, f32 or bf16;
    b_ref: (L, 1, DPAD) f32; o_ref: (TB, DPAD) f32 lane-dense output."""
    wdtype = w_ref.dtype
    h = x_ref[...]                                            # (TB, S) f32
    for li in range(n_layers):                                # static unroll
        # Layer 0 uses only the first state_size input rows of the padded slab
        # (state_size % 8 == 0 -> free sublane slice, K shrinks 128 -> S).
        w = w_ref[0, :state_size, :] if li == 0 else w_ref[li]
        h = jnp.dot(h.astype(wdtype), w, preferred_element_type=jnp.float32)
        h = h + b_ref[li]                                     # (1, DPAD) broadcast
        if li < n_layers - 1:                                 # SELU on hidden layers only
            h = _selu(h)
    # tanh only on action lanes (>= state_size); padded lanes are exactly zero
    # (zero weight cols / bias), tanh(0)=0, and they are sliced off outside.
    lane = jax.lax.broadcasted_iota(jnp.int32, h.shape, 1)
    o_ref[...] = jnp.where(lane >= state_size, jnp.tanh(h), h)


def pack_params(weights, biases, dtype=jnp.float32):
    """One-time packing of per-layer (out, in) weights + (out,) biases into a
    zero-padded, lane-aligned slab.  Do this at init, NOT per forward call.
    dtype=jnp.bfloat16 gives native MXU rate on v6e/v7x (f32 accumulation is
    kept inside the kernel).  Biases stay f32."""
    sizes = [weights[0].shape[1]] + [w.shape[0] for w in weights]
    dpad = _round_up(max(sizes), _LANE)
    n_layers = len(weights)
    w_slab = jnp.zeros((n_layers, dpad, dpad), jnp.float32)
    b_slab = jnp.zeros((n_layers, 1, dpad), jnp.float32)
    for li, (w, b) in enumerate(zip(weights, biases)):
        fan_out, fan_in = w.shape
        w_slab = w_slab.at[li, :fan_in, :fan_out].set(
            jnp.transpose(w).astype(jnp.float32))
        b_slab = b_slab.at[li, 0, :fan_out].set(b.astype(jnp.float32))
    return w_slab.astype(dtype), b_slab


@functools.partial(
    jax.jit, static_argnames=("state_size", "action_size", "block_rows"))
def state_model_fnn_policy_batched(x, w_slab, b_slab, *, state_size,
                                   action_size, block_rows=512):
    """Batched forward.  x: (B, state_size).  Returns (action_pred (B, A),
    state_pred (B, S)).  block_rows is the max batch-tile height; the whole
    batch runs in a single grid step whenever it fits (amortizes the ~0.35 us
    per-step overhead).  On v7x, pick block_rows so large batches yield >= 2
    grid steps and both TensorCores are used ("parallel" batch axis)."""
    n_layers, dpad, _ = w_slab.shape
    B = x.shape[0]
    out_width = state_size + action_size

    # Batch tiling: tb always a multiple of 8 sublanes; collapse to one grid
    # step when the (sublane-padded) batch fits block_rows, otherwise balance
    # tiles so row padding is minimal.
    b_pad8 = _round_up(B, _SUBLANE)
    tb_cap = _round_up(max(int(block_rows), _SUBLANE), _SUBLANE)
    n_steps = max(1, -(-b_pad8 // tb_cap))
    tb = _round_up(-(-b_pad8 // n_steps), _SUBLANE)
    b_pad = tb * n_steps

    x32 = x.astype(jnp.float32)
    x_in = x32 if b_pad == B else jnp.pad(x32, ((0, b_pad - B), (0, 0)))

    kernel = functools.partial(_fnn_policy_kernel, n_layers, state_size)

    w_bytes = w_slab.size * jnp.dtype(w_slab.dtype).itemsize
    flops = 2 * b_pad * dpad * (state_size + (n_layers - 1) * dpad)
    transcendentals = b_pad * n_layers * dpad          # exp per hidden layer + tanh (all lanes)
    bytes_accessed = 4 * (b_pad * state_size + b_slab.size + b_pad * dpad) + w_bytes

    out = pl.pallas_call(
        kernel,
        out_shape=jax.ShapeDtypeStruct((b_pad, dpad), jnp.float32),
        grid=(n_steps,),
        in_specs=[
            # Unpadded activations: last block dim == full array dim (legal).
            pl.BlockSpec((tb, state_size), lambda i: (i, 0)),
            # Grid-invariant weight / bias slabs.
            pl.BlockSpec((n_layers, dpad, dpad), lambda i: (0, 0, 0)),
            pl.BlockSpec((n_layers, 1, dpad), lambda i: (0, 0, 0)),
        ],
        out_specs=pl.BlockSpec((tb, dpad), lambda i: (i, 0)),
        compiler_params=pltpu.CompilerParams(
            dimension_semantics=("parallel",)),
        cost_estimate=pl.CostEstimate(
            flops=flops,
            transcendentals=transcendentals,
            bytes_accessed=bytes_accessed),
    )(x_in, w_slab, b_slab)

    state_pred = out[:B, :state_size]
    action_pred = out[:B, state_size:out_width]   # already tanh'd in-kernel
    return action_pred, state_pred


@functools.partial(jax.jit, static_argnames=("state_size", "action_size"))
def _jnp_forward_from_slabs(x, w_slab, b_slab, *, state_size, action_size):
    """Tiny-batch fast path: same math as the kernel, plain jnp (f32)."""
    n_layers = w_slab.shape[0]
    h = x.astype(jnp.float32)
    for li in range(n_layers):
        w = (w_slab[0, :state_size, :] if li == 0 else w_slab[li]).astype(jnp.float32)
        h = h @ w + b_slab[li, 0]
        if li < n_layers - 1:
            h = _selu(h)
    state_pred = h[:, :state_size]
    action_pred = jnp.tanh(h[:, state_size:state_size + action_size])
    return action_pred, state_pred


def state_model_fnn_policy(in_state, w_slab, b_slab, *, state_size, action_size):
    """Single-state forward matching the PyTorch module (1-D in, 1-D outs).
    B=1 is launch/DMA-overhead dominated (>10x the useful FLOPs), so this path
    skips Pallas; batch requests and call state_model_fnn_policy_batched to use
    the kernel."""
    action, state = _jnp_forward_from_slabs(
        in_state.reshape(1, state_size), w_slab, b_slab,
        state_size=state_size, action_size=action_size)
    return action[0], state[0]


def init_params(key, state_size, action_size, hidden_sizes):
    """Lecun-normal hidden layers (SNN), xavier-normal head, zero biases."""
    sizes = [state_size] + list(hidden_sizes) + [state_size + action_size]
    n_layers = len(sizes) - 1
    keys = jax.random.split(key, n_layers)
    weights, biases = [], []
    for i in range(n_layers):
        fan_in, fan_out = sizes[i], sizes[i + 1]
        if i < n_layers - 1:
            std = (1.0 / fan_in) ** 0.5              # lecun normal
        else:
            std = (2.0 / (fan_in + fan_out)) ** 0.5  # xavier normal (final layer)
        w = std * jax.random.normal(keys[i], (fan_out, fan_in), dtype=jnp.float32)
        b = jnp.zeros((fan_out,), dtype=jnp.float32)
        weights.append(w)
        biases.append(b)
    return weights, biases


def _reference_forward_batched(x, weights, biases, state_size, action_size):
    h = x.astype(jnp.float32)
    n_layers = len(weights)
    for li, (w, b) in enumerate(zip(weights, biases)):
        h = h @ w.T + b
        if li < n_layers - 1:
            h = _selu(h)
    state_pred = h[:, :state_size]
    action_pred = jnp.tanh(h[:, -action_size:])
    return action_pred, state_pred


if __name__ == "__main__":
    state_size = 16
    action_size = 4
    hidden_sizes = [32, 32]
    batch = 128

    key = jax.random.PRNGKey(0)
    k_params, k_single, k_batch = jax.random.split(key, 3)

    weights, biases = init_params(k_params, state_size, action_size, hidden_sizes)
    w32, b32 = pack_params(weights, biases)                          # f32 slab
    wbf, bbf = pack_params(weights, biases, dtype=jnp.bfloat16)      # bf16 slab
    jax.block_until_ready((w32, b32, wbf, bbf))

    x_batch = jax.random.normal(k_batch, (batch, state_size), dtype=jnp.float32)
    ref_a, ref_s = _reference_forward_batched(
        x_batch, weights, biases, state_size, action_size)

    # --- Pallas, single-step grid (default block_rows covers batch=128) ---
    a1, s1 = state_model_fnn_policy_batched(
        x_batch, w32, b32, state_size=state_size, action_size=action_size)
    jax.block_until_ready((a1, s1))
    assert a1.shape == (batch, action_size) and s1.shape == (batch, state_size)
    assert jnp.allclose(a1, ref_a, atol=1e-5, rtol=1e-5)
    assert jnp.allclose(s1, ref_s, atol=1e-5, rtol=1e-5)

    # --- Pallas, multi-step grid (block_rows=64 -> 2 grid steps) ---
    a2, s2 = state_model_fnn_policy_batched(
        x_batch, w32, b32, state_size=state_size, action_size=action_size,
        block_rows=64)
    jax.block_until_ready((a2, s2))
    assert jnp.allclose(a2, ref_a, atol=1e-5, rtol=1e-5)
    assert jnp.allclose(s2, ref_s, atol=1e-5, rtol=1e-5)

    # --- Pallas, ragged batch (not a multiple of 8) exercises row padding ---
    x_rag = x_batch[:49]
    a4, s4 = state_model_fnn_policy_batched(
        x_rag, w32, b32, state_size=state_size, action_size=action_size)
    jax.block_until_ready((a4, s4))
    assert jnp.allclose(a4, ref_a[:49], atol=1e-5, rtol=1e-5)
    assert jnp.allclose(s4, ref_s[:49], atol=1e-5, rtol=1e-5)

    # --- Pallas, bf16 weight slab (native MXU rate on v6e/v7x) ---
    a3, s3 = state_model_fnn_policy_batched(
        x_batch, wbf, bbf, state_size=state_size, action_size=action_size)
    jax.block_until_ready((a3, s3))
    assert jnp.allclose(a3, ref_a, atol=5e-2, rtol=5e-2)
    assert jnp.allclose(s3, ref_s, atol=5e-2, rtol=5e-2)

    # --- single-state forward (module semantics: 1-D in, 1-D outs; jnp path) ---
    in_state = jax.random.normal(k_single, (state_size,), dtype=jnp.float32)
    a0, s0 = state_model_fnn_policy(
        in_state, w32, b32, state_size=state_size, action_size=action_size)
    jax.block_until_ready((a0, s0))
    r_a0, r_s0 = _reference_forward_batched(
        in_state[None, :], weights, biases, state_size, action_size)
    assert a0.shape == (action_size,) and s0.shape == (state_size,)
    assert jnp.allclose(a0, r_a0[0], atol=1e-5, rtol=1e-5)
    assert jnp.allclose(s0, r_s0[0], atol=1e-5, rtol=1e-5)

    print("KERNEL_OK")
</pallas_src>

<mosaic_0001>
module attributes {stable_mosaic.version = 11 : i64} {
  func.func @_fnn_policy_kernel(%arg0: i32, %arg1: memref<128x16xf32, #tpu.memory_space<vmem>>, %arg2: memref<3x128x128xf32, #tpu.memory_space<vmem>>, %arg3: memref<3x1x128xf32, #tpu.memory_space<vmem>>, %arg4: memref<128x128xf32, #tpu.memory_space<vmem>>) attributes {dimension_semantics = [#tpu.dimension_semantics<parallel>], iteration_bounds = array<i64: 1>, scalar_prefetch = 0 : i64, scratch_operands = 0 : i64, tpu.core_type = #tpu.core_type<tc>, window_params = [{transform_indices = @transform_0, window_bounds = array<i64: 128, 16>}, {pipeline_mode = #tpu.pipeline_mode<synchronous>, transform_indices = @transform_1, window_bounds = array<i64: 3, 128, 128>}, {pipeline_mode = #tpu.pipeline_mode<synchronous>, transform_indices = @transform_2, window_bounds = array<i64: 3, 1, 128>}, {transform_indices = @transform_3, window_bounds = array<i64: 128, 128>}]} {
    %c0 = arith.constant 0 : index
    %c0_0 = arith.constant 0 : index
    %0 = vector.load %arg1[%c0, %c0_0] : memref<128x16xf32, #tpu.memory_space<vmem>>, vector<128x16xf32>
    %c0_1 = arith.constant 0 : index
    %c0_2 = arith.constant 0 : index
    %c0_3 = arith.constant 0 : index
    %1 = vector.load %arg2[%c0_1, %c0_2, %c0_3] : memref<3x128x128xf32, #tpu.memory_space<vmem>>, vector<1x16x128xf32>
    %2 = vector.shape_cast %1 : vector<1x16x128xf32> to vector<16x128xf32>
    %cst = arith.constant dense<0.000000e+00> : vector<128x128xf32>
    %3 = tpu.matmul %0, %2, %cst {dimension_numbers = #tpu.dot_dimension_numbers<[1], [0], [0], [1], [0, 0, 1, 1], [], []>} : vector<128x16xf32>, vector<16x128xf32>, vector<128x128xf32> -> vector<128x128xf32>
    %c0_4 = arith.constant 0 : index
    %c0_5 = arith.constant 0 : index
    %c0_6 = arith.constant 0 : index
    %4 = vector.load %arg3[%c0_4, %c0_5, %c0_6] : memref<3x1x128xf32, #tpu.memory_space<vmem>>, vector<1x1x128xf32>
    %5 = vector.shape_cast %4 : vector<1x1x128xf32> to vector<1x128xf32>
    %6 = vector.broadcast %5 : vector<1x128xf32> to vector<128x128xf32>
    %7 = arith.addf %3, %6 : vector<128x128xf32>
    %cst_7 = arith.constant 0.000000e+00 : f32
    %8 = vector.broadcast %cst_7 : f32 to vector<128x128xf32>
    %9 = arith.minimumf %7, %8 : vector<128x128xf32>
    %10 = math.exp %9 : vector<128x128xf32>
    %cst_8 = arith.constant 1.000000e+00 : f32
    %11 = vector.broadcast %cst_8 : f32 to vector<128x128xf32>
    %12 = arith.subf %10, %11 : vector<128x128xf32>
    %cst_9 = arith.constant 1.67326319 : f32
    %13 = vector.broadcast %cst_9 : f32 to vector<128x128xf32>
    %14 = arith.mulf %13, %12 : vector<128x128xf32>
    %cst_10 = arith.constant 0.000000e+00 : f32
    %15 = vector.broadcast %cst_10 : f32 to vector<128x128xf32>
    %16 = arith.cmpf ogt, %7, %15 : vector<128x128xf32>
    %17 = arith.select %16, %7, %14 : vector<128x128xi1>, vector<128x128xf32>
    %cst_11 = arith.constant 1.05070102 : f32
    %18 = vector.broadcast %cst_11 : f32 to vector<128x128xf32>
    %19 = arith.mulf %18, %17 : vector<128x128xf32>
    %c1 = arith.constant 1 : index
    %c0_12 = arith.constant 0 : index
    %c0_13 = arith.constant 0 : index
    %20 = vector.load %arg2[%c1, %c0_12, %c0_13] : memref<3x128x128xf32, #tpu.memory_space<vmem>>, vector<1x128x128xf32>
    %21 = vector.shape_cast %20 : vector<1x128x128xf32> to vector<128x128xf32>
    %cst_14 = arith.constant dense<0.000000e+00> : vector<128x128xf32>
    %22 = tpu.matmul %19, %21, %cst_14 {dimension_numbers = #tpu.dot_dimension_numbers<[1], [0], [0], [1], [0, 0, 1, 1], [], []>} : vector<128x128xf32>, vector<128x128xf32>, vector<128x128xf32> -> vector<128x128xf32>
    %c1_15 = arith.constant 1 : index
    %c0_16 = arith.constant 0 : index
    %c0_17 = arith.constant 0 : index
    %23 = vector.load %arg3[%c1_15, %c0_16, %c0_17] : memref<3x1x128xf32, #tpu.memory_space<vmem>>, vector<1x1x128xf32>
    %24 = vector.shape_cast %23 : vector<1x1x128xf32> to vector<1x128xf32>
    %25 = vector.broadcast %24 : vector<1x128xf32> to vector<128x128xf32>
    %26 = arith.addf %22, %25 : vector<128x128xf32>
    %cst_18 = arith.constant 0.000000e+00 : f32
    %27 = vector.broadcast %cst_18 : f32 to vector<128x128xf32>
    %28 = arith.minimumf %26, %27 : vector<128x128xf32>
    %29 = math.exp %28 : vector<128x128xf32>
    %cst_19 = arith.constant 1.000000e+00 : f32
    %30 = vector.broadcast %cst_19 : f32 to vector<128x128xf32>
    %31 = arith.subf %29, %30 : vector<128x128xf32>
    %cst_20 = arith.constant 1.67326319 : f32
    %32 = vector.broadcast %cst_20 : f32 to vector<128x128xf32>
    %33 = arith.mulf %32, %31 : vector<128x128xf32>
    %cst_21 = arith.constant 0.000000e+00 : f32
    %34 = vector.broadcast %cst_21 : f32 to vector<128x128xf32>
    %35 = arith.cmpf ogt, %26, %34 : vector<128x128xf32>
    %36 = arith.select %35, %26, %33 : vector<128x128xi1>, vector<128x128xf32>
    %cst_22 = arith.constant 1.05070102 : f32
    %37 = vector.broadcast %cst_22 : f32 to vector<128x128xf32>
    %38 = arith.mulf %37, %36 : vector<128x128xf32>
    %c2 = arith.constant 2 : index
    %c0_23 = arith.constant 0 : index
    %c0_24 = arith.constant 0 : index
    %39 = vector.load %arg2[%c2, %c0_23, %c0_24] : memref<3x128x128xf32, #tpu.memory_space<vmem>>, vector<1x128x128xf32>
    %40 = vector.shape_cast %39 : vector<1x128x128xf32> to vector<128x128xf32>
    %cst_25 = arith.constant dense<0.000000e+00> : vector<128x128xf32>
    %41 = tpu.matmul %38, %40, %cst_25 {dimension_numbers = #tpu.dot_dimension_numbers<[1], [0], [0], [1], [0, 0, 1, 1], [], []>} : vector<128x128xf32>, vector<128x128xf32>, vector<128x128xf32> -> vector<128x128xf32>
    %c2_26 = arith.constant 2 : index
    %c0_27 = arith.constant 0 : index
    %c0_28 = arith.constant 0 : index
    %42 = vector.load %arg3[%c2_26, %c0_27, %c0_28] : memref<3x1x128xf32, #tpu.memory_space<vmem>>, vector<1x1x128xf32>
    %43 = vector.shape_cast %42 : vector<1x1x128xf32> to vector<1x128xf32>
    %44 = vector.broadcast %43 : vector<1x128xf32> to vector<128x128xf32>
    %45 = arith.addf %41, %44 : vector<128x128xf32>
    %46 = tpu.iota {dimensions = array<i32: 1>} : vector<128x128xi32>
    %c16_i32 = arith.constant 16 : i32
    %47 = vector.broadcast %c16_i32 : i32 to vector<128x128xi32>
    %48 = arith.cmpi sge, %46, %47 : vector<128x128xi32>
    %49 = math.tanh %45 : vector<128x128xf32>
    %50 = arith.select %48, %49, %45 : vector<128x128xi1>, vector<128x128xf32>
    %c0_29 = arith.constant 0 : index
    %c0_30 = arith.constant 0 : index
    %51 = vector.load %arg4[%c0_29, %c0_30] : memref<128x128xf32, #tpu.memory_space<vmem>>, vector<128x128xf32>
    tpu.vector_store %arg4[%c0_29, %c0_30], %50 {strides = array<i32>} : memref<128x128xf32, #tpu.memory_space<vmem>>, vector<128x128xf32>,
    return
  }
  func.func @transform_0(%arg0: i32) -> (i32, i32) {
    %c0_i32 = arith.constant 0 : i32
    %c0_i32_0 = arith.constant 0 : i32
    return %arg0, %c0_i32 : i32, i32
  }
  func.func @transform_1(%arg0: i32) -> (i32, i32, i32) {
    %c0_i32 = arith.constant 0 : i32
    %c0_i32_0 = arith.constant 0 : i32
    %c0_i32_1 = arith.constant 0 : i32
    %c0_i32_2 = arith.constant 0 : i32
    return %c0_i32, %c0_i32_0, %c0_i32_1 : i32, i32, i32
  }
  func.func @transform_2(%arg0: i32) -> (i32, i32, i32) {
    %c0_i32 = arith.constant 0 : i32
    %c0_i32_0 = arith.constant 0 : i32
    %c0_i32_1 = arith.constant 0 : i32
    %c0_i32_2 = arith.constant 0 : i32
    return %c0_i32, %c0_i32_0, %c0_i32_1 : i32, i32, i32
  }
  func.func @transform_3(%arg0: i32) -> (i32, i32) {
    %c0_i32 = arith.constant 0 : i32
    %c0_i32_0 = arith.constant 0 : i32
    return %arg0, %c0_i32 : i32, i32
  }
}

</mosaic_0001>

<llo_original>
// kernel: state_model_fnn_policy_batched.1
$region0: #{state_model_fnn_policy_batched.1}
  #allocation0 [shape = 'u32[]', space=smem, size = 0x4, offset = 0x4, fixed_abs, tag = 'smem constant byte address 0x4 - core index']
  #allocation1 [shape = 'u32[144,128]{1,0:T(1,128)}', space=vmem, size = 0x12000, scoped, tag = 'internal scratch']
  %s0 = inlined_call_operand.vmem [shape: f32[128,16], index: 0, kind: input, shape index: {}]
  %s1 = inlined_call_operand.hbm [shape: f32[3,128,128], index: 1, kind: input, shape index: {}]
  %s2 = inlined_call_operand.vmem [shape: f32[3,1,128], index: 2, kind: input, shape index: {}]
  %s3 = inlined_call_operand.vmem [shape: f32[128,128], index: 3, kind: output, shape index: {}]
  %s4 = sld [smem:[#allocation0]]
  $region26: #{state_model_fnn_policy_batched.1} parent=0
    _
  %s6 = ssub.s32 1, %s4
  %s7 = scalar_select 0, %s6, %s4
  $region1: #{state_model_fnn_policy_batched.1} parent=0
    #allocation2 [shape = 'u8[196608]{0}', space=vmem, size = 0x30000, scoped, tag = 'input window, operand 1, single buffered']
    #allocation3 [shape = 's32[1]{0}', space=sflag, size = 0x4, scoped, tag = 'scoped memory for state_model_fnn_policy_batched.1']
    %8 = vsyncpa [#allocation3], 0
    // Predicated region
    $region2: #{state_model_fnn_policy_batched.1} parent=1 // pred_check
      _
    $region3: #{state_model_fnn_policy_batched.1} parent=1 // pred_check_branch
      %10 = sbr.rel (0) target = $region5
    $region4: #{state_model_fnn_policy_batched.1} parent=1 // pred_region
      _
    $region5: #{state_model_fnn_policy_batched.1} parent=1 // pred_fallthru
      _
    // Predicated region
    $region6: #{state_model_fnn_policy_batched.1} parent=1 // pred_check
      _
    $region7: #{state_model_fnn_policy_batched.1} parent=1 // pred_check_branch
      %12 = sbr.rel (0) target = $region9
    $region8: #{state_model_fnn_policy_batched.1} parent=1 // pred_region
      %s14 = ssub.s32 6144, 6144
      %15 = vsyncadd [#allocation3], %s14
      %s16 = sshll.u32 [#allocation2], 4
      %s17 = int_to_ptr.vmem [resolvable:$true] %s16
      %22 = dma.hbm_to_vmem [thread:$0]  %s1, 6144, %s17, [#allocation3], 128, 128, 8
    $region9: #{state_model_fnn_policy_batched.1} parent=1 // pred_fallthru
      _
    // Predicated region
    $region10: #{state_model_fnn_policy_batched.1} parent=1 // pred_check
      _
    $region11: #{state_model_fnn_policy_batched.1} parent=1 // pred_check_branch
      %24 = sbr.rel (0) target = $region13
    $region12: #{state_model_fnn_policy_batched.1} parent=1 // pred_region
      _
    $region13: #{state_model_fnn_policy_batched.1} parent=1 // pred_fallthru
      _
    // Predicated region
    $region14: #{state_model_fnn_policy_batched.1} parent=1 // pred_check
      _
    $region15: #{state_model_fnn_policy_batched.1} parent=1 // pred_check_branch
      %26 = sbr.rel (0) target = $region17
    $region16: #{state_model_fnn_policy_batched.1} parent=1 // pred_region
      %27 = dma.done [#allocation3], 6144
    $region17: #{state_model_fnn_policy_batched.1} parent=1 // pred_fallthru
      _
    %v28 = vld [vmem:[%s0] sm:$0xff]
    %v29 = vld [vmem:[%s0 + $0x8] sm:$0xff]
    %v30 = vld [vmem:[%s0 + $0x10] sm:$0xff]
    %v31 = vld [vmem:[%s0 + $0x18] sm:$0xff]
    %v32 = vld [vmem:[%s0 + $0x20] sm:$0xff]
    %v33 = vld [vmem:[%s0 + $0x28] sm:$0xff]
    %v34 = vld [vmem:[%s0 + $0x30] sm:$0xff]
    %v35 = vld [vmem:[%s0 + $0x38] sm:$0xff]
    %v36 = vld [vmem:[%s0 + $0x40] sm:$0xff]
    %v37 = vld [vmem:[%s0 + $0x48] sm:$0xff]
    %v38 = vld [vmem:[%s0 + $0x50] sm:$0xff]
    %v39 = vld [vmem:[%s0 + $0x58] sm:$0xff]
    %v40 = vld [vmem:[%s0 + $0x60] sm:$0xff]
    %v41 = vld [vmem:[%s0 + $0x68] sm:$0xff]
    %v42 = vld [vmem:[%s0 + $0x70] sm:$0xff]
    %v43 = vld [vmem:[%s0 + $0x78] sm:$0xff]
    %v44 = vld [vmem:[#allocation2] sm:$0xff]
    %v45 = vld [vmem:[#allocation2 + $0x8] sm:$0xff]
    %v46 = vld [vmem:[%s2] sm:$0x1]
    %v48 = vlaneseq
    %v49 = vshrl.u32 %v48, 7
    %v50 = vsub.s32 0, %v49
    %v51 = vrot.slane %v46, %v50
    %vm53 = vcmask 130048
    %v55 = vsel %vm53, %v28, 0
    %v58 = vsel %vm53, %v29, 0
    %v61 = vsel %vm53, %v30, 0
    %v64 = vsel %vm53, %v31, 0
    %v67 = vsel %vm53, %v32, 0
    %v70 = vsel %vm53, %v33, 0
    %v73 = vsel %vm53, %v34, 0
    %v76 = vsel %vm53, %v35, 0
    %v79 = vsel %vm53, %v36, 0
    %v82 = vsel %vm53, %v37, 0
    %v85 = vsel %vm53, %v38, 0
    %v88 = vsel %vm53, %v39, 0
    %v91 = vsel %vm53, %v40, 0
    %v94 = vsel %vm53, %v41, 0
    %v97 = vsel %vm53, %v42, 0
    %v100 = vsel %vm53, %v43, 0
    %102 = vmatprep.subr.mxu0 0.0
    %103 = vmatpush1.msra.mxu0 0.0
    %104 = vmatprep.subr.mxu0 0.0
    %105 = vmatpush1.msra.mxu0 0.0
    %106 = vmatprep.subr.mxu0 0.0
    %107 = vmatpush1.msra.mxu0 0.0
    %108 = vmatprep.subr.mxu0 0.0
    %109 = vmatpush1.msra.mxu0 0.0
    %110 = vmatprep.subr.mxu0 0.0
    %111 = vmatpush1.msra.mxu0 0.0
    %112 = vmatprep.subr.mxu0 0.0
    %113 = vmatpush1.msra.mxu0 0.0
    %114 = vmatprep.subr.mxu0 0.0
    %115 = vmatpush1.msra.mxu0 0.0
    %116 = vmatprep.subr.mxu0 0.0
    %117 = vmatpush1.msra.mxu0 0.0
    %118 = vmatprep.subr.mxu0 0.0
    %119 = vmatpush1.msra.mxu0 0.0
    %120 = vmatprep.subr.mxu0 0.0
    %121 = vmatpush1.msra.mxu0 0.0
    %122 = vmatprep.subr.mxu0 0.0
    %123 = vmatpush1.msra.mxu0 0.0
    %124 = vmatprep.subr.mxu0 0.0
    %125 = vmatpush1.msra.mxu0 0.0
    %126 = vmatprep.subr.mxu0 0.0
    %127 = vmatpush1.msra.mxu0 0.0
    %128 = vmatprep.subr.mxu0 0.0
    %129 = vmatpush1.msra.mxu0 0.0
    %130 = vmatprep.subr.mxu0 0.0
    %131 = vmatpush1.msra.mxu0 %v45
    %132 = vmatprep.subr.mxu0 0.0
    %133 = vmatpush1.msra.mxu0 %v44
    %134 = vmatprep.subr.mxu0 0.0
    %135 = vmatpush2.msra.mxu0 0.0
    %136 = vmatprep.subr.mxu0 0.0
    %137 = vmatpush2.msra.mxu0 0.0
    %138 = vmatprep.subr.mxu0 0.0
    %139 = vmatpush2.msra.mxu0 0.0
    %140 = vmatprep.subr.mxu0 0.0
    %141 = vmatpush2.msra.mxu0 0.0
    %142 = vmatprep.subr.mxu0 0.0
    %143 = vmatpush2.msra.mxu0 0.0
    %144 = vmatprep.subr.mxu0 0.0
    %145 = vmatpush2.msra.mxu0 0.0
    %146 = vmatprep.subr.mxu0 0.0
    %147 = vmatpush2.msra.mxu0 0.0
    %148 = vmatprep.subr.mxu0 0.0
    %149 = vmatpush2.msra.mxu0 0.0
    %150 = vmatprep.subr.mxu0 0.0
    %151 = vmatpush2.msra.mxu0 0.0
    %152 = vmatprep.subr.mxu0 0.0
    %153 = vmatpush2.msra.mxu0 0.0
    %154 = vmatprep.subr.mxu0 0.0
    %155 = vmatpush2.msra.mxu0 0.0
    %156 = vmatprep.subr.mxu0 0.0
    %157 = vmatpush2.msra.mxu0 0.0
    %158 = vmatprep.subr.mxu0 0.0
    %159 = vmatpush2.msra.mxu0 0.0
    %160 = vmatprep.subr.mxu0 0.0
    %161 = vmatpush2.msra.mxu0 0.0
    %162 = vmatprep.subr.mxu0 0.0
    %163 = vmatpush2.msra.mxu0 0.0
    %164 = vmatprep.subr.mxu0 0.0
    %165 = vmatpush2.msra.mxu0 0.0
    %166 = vmatprep.mubr.f32.mxu0 0.0
    %167 = vmatmul.mubr.f32.gmra.mxu0 %v55
    %v168 = vpop.f32.mrf.mxu0
    %v169 = vadd.f32 %v51, %v168
    %v170 = vpop.f32.mrf.mxu0
    %171 = vmatprep.mubr.f32.mxu0 0.0
    %172 = vmatmul.mubr.f32.gmra.mxu0 %v58
    %v173 = vpop.f32.mrf.mxu0
    %v174 = vadd.f32 %v51, %v173
    %v175 = vpop.f32.mrf.mxu0
    %176 = vmatprep.mubr.f32.mxu0 0.0
    %177 = vmatmul.mubr.f32.gmra.mxu0 %v61
    %v178 = vpop.f32.mrf.mxu0
    %v179 = vadd.f32 %v51, %v178
    %v180 = vpop.f32.mrf.mxu0
    %181 = vmatprep.mubr.f32.mxu0 0.0
    %182 = vmatmul.mubr.f32.gmra.mxu0 %v64
    %v183 = vpop.f32.mrf.mxu0
    %v184 = vadd.f32 %v51, %v183
    %v185 = vpop.f32.mrf.mxu0
    %186 = vmatprep.mubr.f32.mxu0 0.0
    %187 = vmatmul.mubr.f32.gmra.mxu0 %v67
    %v188 = vpop.f32.mrf.mxu0
    %v189 = vadd.f32 %v51, %v188
    %v190 = vpop.f32.mrf.mxu0
    %191 = vmatprep.mubr.f32.mxu0 0.0
    %192 = vmatmul.mubr.f32.gmra.mxu0 %v70
    %v193 = vpop.f32.mrf.mxu0
    %v194 = vadd.f32 %v51, %v193
    %v195 = vpop.f32.mrf.mxu0
    %196 = vmatprep.mubr.f32.mxu0 0.0
    %197 = vmatmul.mubr.f32.gmra.mxu0 %v73
    %v198 = vpop.f32.mrf.mxu0
    %v199 = vadd.f32 %v51, %v198
    %v200 = vpop.f32.mrf.mxu0
    %201 = vmatprep.mubr.f32.mxu0 0.0
    %202 = vmatmul.mubr.f32.gmra.mxu0 %v76
    %v203 = vpop.f32.mrf.mxu0
    %v204 = vadd.f32 %v51, %v203
    %v205 = vpop.f32.mrf.mxu0
    %206 = vmatprep.mubr.f32.mxu0 0.0
    %207 = vmatmul.mubr.f32.gmra.mxu0 %v79
    %v208 = vpop.f32.mrf.mxu0
    %v209 = vadd.f32 %v51, %v208
    %v210 = vpop.f32.mrf.mxu0
    %211 = vmatprep.mubr.f32.mxu0 0.0
    %212 = vmatmul.mubr.f32.gmra.mxu0 %v82
    %v213 = vpop.f32.mrf.mxu0
    %v214 = vadd.f32 %v51, %v213
    %v215 = vpop.f32.mrf.mxu0
    %216 = vmatprep.mubr.f32.mxu0 0.0
    %217 = vmatmul.mubr.f32.gmra.mxu0 %v85
    %v218 = vpop.f32.mrf.mxu0
    %v219 = vadd.f32 %v51, %v218
    %v220 = vpop.f32.mrf.mxu0
    %221 = vmatprep.mubr.f32.mxu0 0.0
    %222 = vmatmul.mubr.f32.gmra.mxu0 %v88
    %v223 = vpop.f32.mrf.mxu0
    %v224 = vadd.f32 %v51, %v223
    %v225 = vpop.f32.mrf.mxu0
    %226 = vmatprep.mubr.f32.mxu0 0.0
    %227 = vmatmul.mubr.f32.gmra.mxu0 %v91
    %v228 = vpop.f32.mrf.mxu0
    %v229 = vadd.f32 %v51, %v228
    %v230 = vpop.f32.mrf.mxu0
    %231 = vmatprep.mubr.f32.mxu0 0.0
    %232 = vmatmul.mubr.f32.gmra.mxu0 %v94
    %v233 = vpop.f32.mrf.mxu0
    %v234 = vadd.f32 %v51, %v233
    %v235 = vpop.f32.mrf.mxu0
    %236 = vmatprep.mubr.f32.mxu0 0.0
    %237 = vmatmul.mubr.f32.gmra.mxu0 %v97
    %v238 = vpop.f32.mrf.mxu0
    %v239 = vadd.f32 %v51, %v238
    %v240 = vpop.f32.mrf.mxu0
    %241 = vmatprep.mubr.f32.mxu0 0.0
    %242 = vmatmul.mubr.f32.gmra.mxu0 %v100
    %v243 = vpop.f32.mrf.mxu0
    %v244 = vadd.f32 %v51, %v243
    %v245 = vpop.f32.mrf.mxu0
    %246 = vdwg.mxu0
    %v247 = vmin.f32 %v169, 0.0
    %v248 = vmin.f32 %v174, 0.0
    %v249 = vmin.f32 %v179, 0.0
    %v250 = vmin.f32 %v184, 0.0
    %v251 = vmin.f32 %v189, 0.0
    %v252 = vmin.f32 %v194, 0.0
    %v253 = vmin.f32 %v199, 0.0
    %v254 = vmin.f32 %v204, 0.0
    %v255 = vmin.f32 %v209, 0.0
    %v256 = vmin.f32 %v214, 0.0
    %v257 = vmin.f32 %v219, 0.0
    %v258 = vmin.f32 %v224, 0.0
    %v259 = vmin.f32 %v229, 0.0
    %v260 = vmin.f32 %v234, 0.0
    %v261 = vmin.f32 %v239, 0.0
    %v262 = vmin.f32 %v244, 0.0
    %v263 = vmul.f32 %v247, 1.442695
    %v264 = vpow.pop %v263
    %v265 = vmul.f32 %v248, 1.442695
    %v266 = vpow.pop %v265
    %v267 = vmul.f32 %v249, 1.442695
    %v268 = vpow.pop %v267
    %v269 = vmul.f32 %v250, 1.442695
    %v270 = vpow.pop %v269
    %v271 = vmul.f32 %v251, 1.442695
    %v272 = vpow.pop %v271
    %v273 = vmul.f32 %v252, 1.442695
    %v274 = vpow.pop %v273
    %v275 = vmul.f32 %v253, 1.442695
    %v276 = vpow.pop %v275
    %v277 = vmul.f32 %v254, 1.442695
    %v278 = vpow.pop %v277
    %v279 = vmul.f32 %v255, 1.442695
    %v280 = vpow.pop %v279
    %v281 = vmul.f32 %v256, 1.442695
    %v282 = vpow.pop %v281
    %v283 = vmul.f32 %v257, 1.442695
    %v284 = vpow.pop %v283
    %v285 = vmul.f32 %v258, 1.442695
    %v286 = vpow.pop %v285
    %v287 = vmul.f32 %v259, 1.442695
    %v288 = vpow.pop %v287
    %v289 = vmul.f32 %v260, 1.442695
    %v290 = vpow.pop %v289
    %v291 = vmul.f32 %v261, 1.442695
    %v292 = vpow.pop %v291
    %v293 = vmul.f32 %v262, 1.442695
    %v294 = vpow.pop %v293
    %v295 = vsub.f32 %v264, 1.0
    %v296 = vsub.f32 %v266, 1.0
    %v297 = vsub.f32 %v268, 1.0
    %v298 = vsub.f32 %v270, 1.0
    %v299 = vsub.f32 %v272, 1.0
    %v300 = vsub.f32 %v274, 1.0
    %v301 = vsub.f32 %v276, 1.0
    %v302 = vsub.f32 %v278, 1.0
    %v303 = vsub.f32 %v280, 1.0
    %v304 = vsub.f32 %v282, 1.0
    %v305 = vsub.f32 %v284, 1.0
    %v306 = vsub.f32 %v286, 1.0
    %v307 = vsub.f32 %v288, 1.0
    %v308 = vsub.f32 %v290, 1.0
    %v309 = vsub.f32 %v292, 1.0
    %v310 = vsub.f32 %v294, 1.0
    %v311 = vmul.f32 %v295, 1.6732632
    %v312 = vmul.f32 %v296, 1.6732632
    %v313 = vmul.f32 %v297, 1.6732632
    %v314 = vmul.f32 %v298, 1.6732632
    %v315 = vmul.f32 %v299, 1.6732632
    %v316 = vmul.f32 %v300, 1.6732632
    %v317 = vmul.f32 %v301, 1.6732632
    %v318 = vmul.f32 %v302, 1.6732632
    %v319 = vmul.f32 %v303, 1.6732632
    %v320 = vmul.f32 %v304, 1.6732632
    %v321 = vmul.f32 %v305, 1.6732632
    %v322 = vmul.f32 %v306, 1.6732632
    %v323 = vmul.f32 %v307, 1.6732632
    %v324 = vmul.f32 %v308, 1.6732632
    %v325 = vmul.f32 %v309, 1.6732632
    %v326 = vmul.f32 %v310, 1.6732632
    %vm327 = vcmp.gt.f32.partialorder %v169, 0.0
    %vm328 = vcmp.gt.f32.partialorder %v174, 0.0
    %vm329 = vcmp.gt.f32.partialorder %v179, 0.0
    %vm330 = vcmp.gt.f32.partialorder %v184, 0.0
    %vm331 = vcmp.gt.f32.partialorder %v189, 0.0
    %vm332 = vcmp.gt.f32.partialorder %v194, 0.0
    %vm333 = vcmp.gt.f32.partialorder %v199, 0.0
    %vm334 = vcmp.gt.f32.partialorder %v204, 0.0
    %vm335 = vcmp.gt.f32.partialorder %v209, 0.0
    %vm336 = vcmp.gt.f32.partialorder %v214, 0.0
    %vm337 = vcmp.gt.f32.partialorder %v219, 0.0
    %vm338 = vcmp.gt.f32.partialorder %v224, 0.0
    %vm339 = vcmp.gt.f32.partialorder %v229, 0.0
    %vm340 = vcmp.gt.f32.partialorder %v234, 0.0
    %vm341 = vcmp.gt.f32.partialorder %v239, 0.0
    %vm342 = vcmp.gt.f32.partialorder %v244, 0.0
    %v343 = vsel %vm327, %v169, %v311
    %v344 = vsel %vm328, %v174, %v312
    %v345 = vsel %vm329, %v179, %v313
    %v346 = vsel %vm330, %v184, %v314
    %v347 = vsel %vm331, %v189, %v315
    %v348 = vsel %vm332, %v194, %v316
    %v349 = vsel %vm333, %v199, %v317
    %v350 = vsel %vm334, %v204, %v318
    %v351 = vsel %vm335, %v209, %v319
    %v352 = vsel %vm336, %v214, %v320
    %v353 = vsel %vm337, %v219, %v321
    %v354 = vsel %vm338, %v224, %v322
    %v355 = vsel %vm339, %v229, %v323
    %v356 = vsel %vm340, %v234, %v324
    %v357 = vsel %vm341, %v239, %v325
    %v358 = vsel %vm342, %v244, %v326
    %v359 = vmul.f32 %v343, 1.050701
    %v360 = vmul.f32 %v344, 1.050701
    %v361 = vmul.f32 %v345, 1.050701
    %v362 = vmul.f32 %v346, 1.050701
    %v363 = vmul.f32 %v347, 1.050701
    %v364 = vmul.f32 %v348, 1.050701
    %v365 = vmul.f32 %v349, 1.050701
    %v366 = vmul.f32 %v350, 1.050701
    %v367 = vmul.f32 %v351, 1.050701
    %v368 = vmul.f32 %v352, 1.050701
    %v369 = vmul.f32 %v353, 1.050701
    %v370 = vmul.f32 %v354, 1.050701
    %v371 = vmul.f32 %v355, 1.050701
    %v372 = vmul.f32 %v356, 1.050701
    %v373 = vmul.f32 %v357, 1.050701
    %v374 = vmul.f32 %v358, 1.050701
    %s375 = scalar_lea.vmem [#allocation2], 128
    %v376 = vld [vmem:[%s375] sm:$0xff]
    %v377 = vld [vmem:[%s375 + $0x8] sm:$0xff]
    %v378 = vld [vmem:[%s375 + $0x10] sm:$0xff]
    %v379 = vld [vmem:[%s375 + $0x18] sm:$0xff]
    %v380 = vld [vmem:[%s375 + $0x20] sm:$0xff]
    %v381 = vld [vmem:[%s375 + $0x28] sm:$0xff]
    %v382 = vld [vmem:[%s375 + $0x30] sm:$0xff]
    %v383 = vld [vmem:[%s375 + $0x38] sm:$0xff]
    %v384 = vld [vmem:[%s375 + $0x40] sm:$0xff]
    %v385 = vld [vmem:[%s375 + $0x48] sm:$0xff]
    %v386 = vld [vmem:[%s375 + $0x50] sm:$0xff]
    %v387 = vld [vmem:[%s375 + $0x58] sm:$0xff]
    %v388 = vld [vmem:[%s375 + $0x60] sm:$0xff]
    %v389 = vld [vmem:[%s375 + $0x68] sm:$0xff]
    %v390 = vld [vmem:[%s375 + $0x70] sm:$0xff]
    %v391 = vld [vmem:[%s375 + $0x78] sm:$0xff]
    %s392 = scalar_lea.vmem %s2, 1
    %v393 = vld [vmem:[%s392] sm:$0x1]
    %v395 = vlaneseq
    %v396 = vshrl.u32 %v395, 7
    %v397 = vsub.s32 0, %v396
    %v398 = vrot.slane %v393, %v397
    %400 = vmatprep.subr.mxu0 0.0
    %401 = vmatpush1.msra.mxu0 %v391
    %402 = vmatprep.subr.mxu0 0.0
    %403 = vmatpush1.msra.mxu0 %v390
    %404 = vmatprep.subr.mxu0 0.0
    %405 = vmatpush1.msra.mxu0 %v389
    %406 = vmatprep.subr.mxu0 0.0
    %407 = vmatpush1.msra.mxu0 %v388
    %408 = vmatprep.subr.mxu0 0.0
    %409 = vmatpush1.msra.mxu0 %v387
    %410 = vmatprep.subr.mxu0 0.0
    %411 = vmatpush1.msra.mxu0 %v386
    %412 = vmatprep.subr.mxu0 0.0
    %413 = vmatpush1.msra.mxu0 %v385
    %414 = vmatprep.subr.mxu0 0.0
    %415 = vmatpush1.msra.mxu0 %v384
    %416 = vmatprep.subr.mxu0 0.0
    %417 = vmatpush1.msra.mxu0 %v383
    %418 = vmatprep.subr.mxu0 0.0
    %419 = vmatpush1.msra.mxu0 %v382
    %420 = vmatprep.subr.mxu0 0.0
    %421 = vmatpush1.msra.mxu0 %v381
    %422 = vmatprep.subr.mxu0 0.0
    %423 = vmatpush1.msra.mxu0 %v380
    %424 = vmatprep.subr.mxu0 0.0
    %425 = vmatpush1.msra.mxu0 %v379
    %426 = vmatprep.subr.mxu0 0.0
    %427 = vmatpush1.msra.mxu0 %v378
    %428 = vmatprep.subr.mxu0 0.0
    %429 = vmatpush1.msra.mxu0 %v377
    %430 = vmatprep.subr.mxu0 0.0
    %431 = vmatpush1.msra.mxu0 %v376
    %432 = vmatprep.subr.mxu0 0.0
    %433 = vmatpush2.msra.mxu0 0.0
    %434 = vmatprep.subr.mxu0 0.0
    %435 = vmatpush2.msra.mxu0 0.0
    %436 = vmatprep.subr.mxu0 0.0
    %437 = vmatpush2.msra.mxu0 0.0
    %438 = vmatprep.subr.mxu0 0.0
    %439 = vmatpush2.msra.mxu0 0.0
    %440 = vmatprep.subr.mxu0 0.0
    %441 = vmatpush2.msra.mxu0 0.0
    %442 = vmatprep.subr.mxu0 0.0
    %443 = vmatpush2.msra.mxu0 0.0
    %444 = vmatprep.subr.mxu0 0.0
    %445 = vmatpush2.msra.mxu0 0.0
    %446 = vmatprep.subr.mxu0 0.0
    %447 = vmatpush2.msra.mxu0 0.0
    %448 = vmatprep.subr.mxu0 0.0
    %449 = vmatpush2.msra.mxu0 0.0
    %450 = vmatprep.subr.mxu0 0.0
    %451 = vmatpush2.msra.mxu0 0.0
    %452 = vmatprep.subr.mxu0 0.0
    %453 = vmatpush2.msra.mxu0 0.0
    %454 = vmatprep.subr.mxu0 0.0
    %455 = vmatpush2.msra.mxu0 0.0
    %456 = vmatprep.subr.mxu0 0.0
    %457 = vmatpush2.msra.mxu0 0.0
    %458 = vmatprep.subr.mxu0 0.0
    %459 = vmatpush2.msra.mxu0 0.0
    %460 = vmatprep.subr.mxu0 0.0
    %461 = vmatpush2.msra.mxu0 0.0
    %462 = vmatprep.subr.mxu0 0.0
    %463 = vmatpush2.msra.mxu0 0.0
    %464 = vmatprep.mubr.f32.mxu0 0.0
    %465 = vmatmul.mubr.f32.gmra.mxu0 %v359
    %v466 = vpop.f32.mrf.mxu0
    %v467 = vadd.f32 %v398, %v466
    %v468 = vpop.f32.mrf.mxu0
    %469 = vmatprep.mubr.f32.mxu0 0.0
    %470 = vmatmul.mubr.f32.gmra.mxu0 %v360
    %v471 = vpop.f32.mrf.mxu0
    %v472 = vadd.f32 %v398, %v471
    %v473 = vpop.f32.mrf.mxu0
    %474 = vmatprep.mubr.f32.mxu0 0.0
    %475 = vmatmul.mubr.f32.gmra.mxu0 %v361
    %v476 = vpop.f32.mrf.mxu0
    %v477 = vadd.f32 %v398, %v476
    %v478 = vpop.f32.mrf.mxu0
    %479 = vmatprep.mubr.f32.mxu0 0.0
    %480 = vmatmul.mubr.f32.gmra.mxu0 %v362
    %v481 = vpop.f32.mrf.mxu0
    %v482 = vadd.f32 %v398, %v481
    %v483 = vpop.f32.mrf.mxu0
    %484 = vmatprep.mubr.f32.mxu0 0.0
    %485 = vmatmul.mubr.f32.gmra.mxu0 %v363
    %v486 = vpop.f32.mrf.mxu0
    %v487 = vadd.f32 %v398, %v486
    %v488 = vpop.f32.mrf.mxu0
    %489 = vmatprep.mubr.f32.mxu0 0.0
    %490 = vmatmul.mubr.f32.gmra.mxu0 %v364
    %v491 = vpop.f32.mrf.mxu0
    %v492 = vadd.f32 %v398, %v491
    %v493 = vpop.f32.mrf.mxu0
    %494 = vmatprep.mubr.f32.mxu0 0.0
    %495 = vmatmul.mubr.f32.gmra.mxu0 %v365
    %v496 = vpop.f32.mrf.mxu0
    %v497 = vadd.f32 %v398, %v496
    %v498 = vpop.f32.mrf.mxu0
    %499 = vmatprep.mubr.f32.mxu0 0.0
    %500 = vmatmul.mubr.f32.gmra.mxu0 %v366
    %v501 = vpop.f32.mrf.mxu0
    %v502 = vadd.f32 %v398, %v501
    %v503 = vpop.f32.mrf.mxu0
    %504 = vmatprep.mubr.f32.mxu0 0.0
    %505 = vmatmul.mubr.f32.gmra.mxu0 %v367
    %v506 = vpop.f32.mrf.mxu0
    %v507 = vadd.f32 %v398, %v506
    %v508 = vpop.f32.mrf.mxu0
    %509 = vmatprep.mubr.f32.mxu0 0.0
    %510 = vmatmul.mubr.f32.gmra.mxu0 %v368
    %v511 = vpop.f32.mrf.mxu0
    %v512 = vadd.f32 %v398, %v511
    %v513 = vpop.f32.mrf.mxu0
    %514 = vmatprep.mubr.f32.mxu0 0.0
    %515 = vmatmul.mubr.f32.gmra.mxu0 %v369
    %v516 = vpop.f32.mrf.mxu0
    %v517 = vadd.f32 %v398, %v516
    %v518 = vpop.f32.mrf.mxu0
    %519 = vmatprep.mubr.f32.mxu0 0.0
    %520 = vmatmul.mubr.f32.gmra.mxu0 %v370
    %v521 = vpop.f32.mrf.mxu0
    %v522 = vadd.f32 %v398, %v521
    %v523 = vpop.f32.mrf.mxu0
    %524 = vmatprep.mubr.f32.mxu0 0.0
    %525 = vmatmul.mubr.f32.gmra.mxu0 %v371
    %v526 = vpop.f32.mrf.mxu0
    %v527 = vadd.f32 %v398, %v526
    %v528 = vpop.f32.mrf.mxu0
    %529 = vmatprep.mubr.f32.mxu0 0.0
    %530 = vmatmul.mubr.f32.gmra.mxu0 %v372
    %v531 = vpop.f32.mrf.mxu0
    %v532 = vadd.f32 %v398, %v531
    %v533 = vpop.f32.mrf.mxu0
    %534 = vmatprep.mubr.f32.mxu0 0.0
    %535 = vmatmul.mubr.f32.gmra.mxu0 %v373
    %v536 = vpop.f32.mrf.mxu0
    %v537 = vadd.f32 %v398, %v536
    %v538 = vpop.f32.mrf.mxu0
    %539 = vmatprep.mubr.f32.mxu0 0.0
    %540 = vmatmul.mubr.f32.gmra.mxu0 %v374
    %v541 = vpop.f32.mrf.mxu0
    %v542 = vadd.f32 %v398, %v541
    %v543 = vpop.f32.mrf.mxu0
    %544 = vdwg.mxu0
    %v545 = vmin.f32 %v467, 0.0
    %v546 = vmin.f32 %v472, 0.0
    %v547 = vmin.f32 %v477, 0.0
    %v548 = vmin.f32 %v482, 0.0
    %v549 = vmin.f32 %v487, 0.0
    %v550 = vmin.f32 %v492, 0.0
    %v551 = vmin.f32 %v497, 0.0
    %v552 = vmin.f32 %v502, 0.0
    %v553 = vmin.f32 %v507, 0.0
    %v554 = vmin.f32 %v512, 0.0
    %v555 = vmin.f32 %v517, 0.0
    %v556 = vmin.f32 %v522, 0.0
    %v557 = vmin.f32 %v527, 0.0
    %v558 = vmin.f32 %v532, 0.0
    %v559 = vmin.f32 %v537, 0.0
    %v560 = vmin.f32 %v542, 0.0
    %v561 = vmul.f32 %v545, 1.442695
    %v562 = vpow.pop %v561
    %v563 = vmul.f32 %v546, 1.442695
    %v564 = vpow.pop %v563
    %v565 = vmul.f32 %v547, 1.442695
    %v566 = vpow.pop %v565
    %v567 = vmul.f32 %v548, 1.442695
    %v568 = vpow.pop %v567
    %v569 = vmul.f32 %v549, 1.442695
    %v570 = vpow.pop %v569
    %v571 = vmul.f32 %v550, 1.442695
    %v572 = vpow.pop %v571
    %v573 = vmul.f32 %v551, 1.442695
    %v574 = vpow.pop %v573
    %v575 = vmul.f32 %v552, 1.442695
    %v576 = vpow.pop %v575
    %v577 = vmul.f32 %v553, 1.442695
    %v578 = vpow.pop %v577
    %v579 = vmul.f32 %v554, 1.442695
    %v580 = vpow.pop %v579
    %v581 = vmul.f32 %v555, 1.442695
    %v582 = vpow.pop %v581
    %v583 = vmul.f32 %v556, 1.442695
    %v584 = vpow.pop %v583
    %v585 = vmul.f32 %v557, 1.442695
    %v586 = vpow.pop %v585
    %v587 = vmul.f32 %v558, 1.442695
    %v588 = vpow.pop %v587
    %v589 = vmul.f32 %v559, 1.442695
    %v590 = vpow.pop %v589
    %v591 = vmul.f32 %v560, 1.442695
    %v592 = vpow.pop %v591
    %v593 = vsub.f32 %v562, 1.0
    %v594 = vsub.f32 %v564, 1.0
    %v595 = vsub.f32 %v566, 1.0
    %v596 = vsub.f32 %v568, 1.0
    %v597 = vsub.f32 %v570, 1.0
    %v598 = vsub.f32 %v572, 1.0
    %v599 = vsub.f32 %v574, 1.0
    %v600 = vsub.f32 %v576, 1.0
    %v601 = vsub.f32 %v578, 1.0
    %v602 = vsub.f32 %v580, 1.0
    %v603 = vsub.f32 %v582, 1.0
    %v604 = vsub.f32 %v584, 1.0
    %v605 = vsub.f32 %v586, 1.0
    %v606 = vsub.f32 %v588, 1.0
    %v607 = vsub.f32 %v590, 1.0
    %v608 = vsub.f32 %v592, 1.0
    %v609 = vmul.f32 %v593, 1.6732632
    %v610 = vmul.f32 %v594, 1.6732632
    %v611 = vmul.f32 %v595, 1.6732632
    %v612 = vmul.f32 %v596, 1.6732632
    %v613 = vmul.f32 %v597, 1.6732632
    %v614 = vmul.f32 %v598, 1.6732632
    %v615 = vmul.f32 %v599, 1.6732632
    %v616 = vmul.f32 %v600, 1.6732632
    %v617 = vmul.f32 %v601, 1.6732632
    %v618 = vmul.f32 %v602, 1.6732632
    %v619 = vmul.f32 %v603, 1.6732632
    %v620 = vmul.f32 %v604, 1.6732632
    %v621 = vmul.f32 %v605, 1.6732632
    %v622 = vmul.f32 %v606, 1.6732632
    %v623 = vmul.f32 %v607, 1.6732632
    %v624 = vmul.f32 %v608, 1.6732632
    %vm625 = vcmp.gt.f32.partialorder %v467, 0.0
    %vm626 = vcmp.gt.f32.partialorder %v472, 0.0
    %vm627 = vcmp.gt.f32.partialorder %v477, 0.0
    %vm628 = vcmp.gt.f32.partialorder %v482, 0.0
    %vm629 = vcmp.gt.f32.partialorder %v487, 0.0
    %vm630 = vcmp.gt.f32.partialorder %v492, 0.0
    %vm631 = vcmp.gt.f32.partialorder %v497, 0.0
    %vm632 = vcmp.gt.f32.partialorder %v502, 0.0
    %vm633 = vcmp.gt.f32.partialorder %v507, 0.0
    %vm634 = vcmp.gt.f32.partialorder %v512, 0.0
    %vm635 = vcmp.gt.f32.partialorder %v517, 0.0
    %vm636 = vcmp.gt.f32.partialorder %v522, 0.0
    %vm637 = vcmp.gt.f32.partialorder %v527, 0.0
    %vm638 = vcmp.gt.f32.partialorder %v532, 0.0
    %vm639 = vcmp.gt.f32.partialorder %v537, 0.0
    %vm640 = vcmp.gt.f32.partialorder %v542, 0.0
    %v641 = vsel %vm625, %v467, %v609
    %v642 = vsel %vm626, %v472, %v610
    %v643 = vsel %vm627, %v477, %v611
    %v644 = vsel %vm628, %v482, %v612
    %v645 = vsel %vm629, %v487, %v613
    %v646 = vsel %vm630, %v492, %v614
    %v647 = vsel %vm631, %v497, %v615
    %v648 = vsel %vm632, %v502, %v616
    %v649 = vsel %vm633, %v507, %v617
    %v650 = vsel %vm634, %v512, %v618
    %v651 = vsel %vm635, %v517, %v619
    %v652 = vsel %vm636, %v522, %v620
    %v653 = vsel %vm637, %v527, %v621
    %v654 = vsel %vm638, %v532, %v622
    %v655 = vsel %vm639, %v537, %v623
    %v656 = vsel %vm640, %v542, %v624
    %v657 = vmul.f32 %v641, 1.050701
    %v658 = vmul.f32 %v642, 1.050701
    %v659 = vmul.f32 %v643, 1.050701
    %v660 = vmul.f32 %v644, 1.050701
    %v661 = vmul.f32 %v645, 1.050701
    %v662 = vmul.f32 %v646, 1.050701
    %v663 = vmul.f32 %v647, 1.050701
    %v664 = vmul.f32 %v648, 1.050701
    %v665 = vmul.f32 %v649, 1.050701
    %v666 = vmul.f32 %v650, 1.050701
    %v667 = vmul.f32 %v651, 1.050701
    %v668 = vmul.f32 %v652, 1.050701
    %v669 = vmul.f32 %v653, 1.050701
    %v670 = vmul.f32 %v654, 1.050701
    %v671 = vmul.f32 %v655, 1.050701
    %v672 = vmul.f32 %v656, 1.050701
    %s673 = scalar_lea.vmem [#allocation2], 256
    %v674 = vld [vmem:[%s673] sm:$0xff]
    %v675 = vld [vmem:[%s673 + $0x8] sm:$0xff]
    %v676 = vld [vmem:[%s673 + $0x10] sm:$0xff]
    %v677 = vld [vmem:[%s673 + $0x18] sm:$0xff]
    %v678 = vld [vmem:[%s673 + $0x20] sm:$0xff]
    %v679 = vld [vmem:[%s673 + $0x28] sm:$0xff]
    %v680 = vld [vmem:[%s673 + $0x30] sm:$0xff]
    %v681 = vld [vmem:[%s673 + $0x38] sm:$0xff]
    %v682 = vld [vmem:[%s673 + $0x40] sm:$0xff]
    %v683 = vld [vmem:[%s673 + $0x48] sm:$0xff]
    %v684 = vld [vmem:[%s673 + $0x50] sm:$0xff]
    %v685 = vld [vmem:[%s673 + $0x58] sm:$0xff]
    %v686 = vld [vmem:[%s673 + $0x60] sm:$0xff]
    %v687 = vld [vmem:[%s673 + $0x68] sm:$0xff]
    %v688 = vld [vmem:[%s673 + $0x70] sm:$0xff]
    %v689 = vld [vmem:[%s673 + $0x78] sm:$0xff]
    %s690 = scalar_lea.vmem %s2, 2
    %v691 = vld [vmem:[%s690] sm:$0x1]
    %v693 = vlaneseq
    %v694 = vshrl.u32 %v693, 7
    %v695 = vsub.s32 0, %v694
    %v696 = vrot.slane %v691, %v695
    %698 = vmatprep.subr.mxu0 0.0
    %699 = vmatpush1.msra.mxu0 %v689
    %700 = vmatprep.subr.mxu0 0.0
    %701 = vmatpush1.msra.mxu0 %v688
    %702 = vmatprep.subr.mxu0 0.0
    %703 = vmatpush1.msra.mxu0 %v687
    %704 = vmatprep.subr.mxu0 0.0
    %705 = vmatpush1.msra.mxu0 %v686
    %706 = vmatprep.subr.mxu0 0.0
    %707 = vmatpush1.msra.mxu0 %v685
    %708 = vmatprep.subr.mxu0 0.0
    %709 = vmatpush1.msra.mxu0 %v684
    %710 = vmatprep.subr.mxu0 0.0
    %711 = vmatpush1.msra.mxu0 %v683
    %712 = vmatprep.subr.mxu0 0.0
    %713 = vmatpush1.msra.mxu0 %v682
    %714 = vmatprep.subr.mxu0 0.0
    %715 = vmatpush1.msra.mxu0 %v681
    %716 = vmatprep.subr.mxu0 0.0
    %717 = vmatpush1.msra.mxu0 %v680
    %718 = vmatprep.subr.mxu0 0.0
    %719 = vmatpush1.msra.mxu0 %v679
    %720 = vmatprep.subr.mxu0 0.0
    %721 = vmatpush1.msra.mxu0 %v678
    %722 = vmatprep.subr.mxu0 0.0
    %723 = vmatpush1.msra.mxu0 %v677
    %724 = vmatprep.subr.mxu0 0.0
    %725 = vmatpush1.msra.mxu0 %v676
    %726 = vmatprep.subr.mxu0 0.0
    %727 = vmatpush1.msra.mxu0 %v675
    %728 = vmatprep.subr.mxu0 0.0
    %729 = vmatpush1.msra.mxu0 %v674
    %730 = vmatprep.subr.mxu0 0.0
    %731 = vmatpush2.msra.mxu0 0.0
    %732 = vmatprep.subr.mxu0 0.0
    %733 = vmatpush2.msra.mxu0 0.0
    %734 = vmatprep.subr.mxu0 0.0
    %735 = vmatpush2.msra.mxu0 0.0
    %736 = vmatprep.subr.mxu0 0.0
    %737 = vmatpush2.msra.mxu0 0.0
    %738 = vmatprep.subr.mxu0 0.0
    %739 = vmatpush2.msra.mxu0 0.0
    %740 = vmatprep.subr.mxu0 0.0
    %741 = vmatpush2.msra.mxu0 0.0
    %742 = vmatprep.subr.mxu0 0.0
    %743 = vmatpush2.msra.mxu0 0.0
    %744 = vmatprep.subr.mxu0 0.0
    %745 = vmatpush2.msra.mxu0 0.0
    %746 = vmatprep.subr.mxu0 0.0
    %747 = vmatpush2.msra.mxu0 0.0
    %748 = vmatprep.subr.mxu0 0.0
    %749 = vmatpush2.msra.mxu0 0.0
    %750 = vmatprep.subr.mxu0 0.0
    %751 = vmatpush2.msra.mxu0 0.0
    %752 = vmatprep.subr.mxu0 0.0
    %753 = vmatpush2.msra.mxu0 0.0
    %754 = vmatprep.subr.mxu0 0.0
    %755 = vmatpush2.msra.mxu0 0.0
    %756 = vmatprep.subr.mxu0 0.0
    %757 = vmatpush2.msra.mxu0 0.0
    %758 = vmatprep.subr.mxu0 0.0
    %759 = vmatpush2.msra.mxu0 0.0
    %760 = vmatprep.subr.mxu0 0.0
    %761 = vmatpush2.msra.mxu0 0.0
    %762 = vmatprep.mubr.f32.mxu0 0.0
    %763 = vmatmul.mubr.f32.gmra.mxu0 %v657
    %v764 = vpop.f32.mrf.mxu0
    %v765 = vadd.f32 %v696, %v764
    %v766 = vpop.f32.mrf.mxu0
    %767 = vmatprep.mubr.f32.mxu0 0.0
    %768 = vmatmul.mubr.f32.gmra.mxu0 %v658
    %v769 = vpop.f32.mrf.mxu0
    %v770 = vadd.f32 %v696, %v769
    %v771 = vpop.f32.mrf.mxu0
    %772 = vmatprep.mubr.f32.mxu0 0.0
    %773 = vmatmul.mubr.f32.gmra.mxu0 %v659
    %v774 = vpop.f32.mrf.mxu0
    %v775 = vadd.f32 %v696, %v774
    %v776 = vpop.f32.mrf.mxu0
    %777 = vmatprep.mubr.f32.mxu0 0.0
    %778 = vmatmul.mubr.f32.gmra.mxu0 %v660
    %v779 = vpop.f32.mrf.mxu0
    %v780 = vadd.f32 %v696, %v779
    %v781 = vpop.f32.mrf.mxu0
    %782 = vmatprep.mubr.f32.mxu0 0.0
    %783 = vmatmul.mubr.f32.gmra.mxu0 %v661
    %v784 = vpop.f32.mrf.mxu0
    %v785 = vadd.f32 %v696, %v784
    %v786 = vpop.f32.mrf.mxu0
    %787 = vmatprep.mubr.f32.mxu0 0.0
    %788 = vmatmul.mubr.f32.gmra.mxu0 %v662
    %v789 = vpop.f32.mrf.mxu0
    %v790 = vadd.f32 %v696, %v789
    %v791 = vpop.f32.mrf.mxu0
    %792 = vmatprep.mubr.f32.mxu0 0.0
    %793 = vmatmul.mubr.f32.gmra.mxu0 %v663
    %v794 = vpop.f32.mrf.mxu0
    %v795 = vadd.f32 %v696, %v794
    %v796 = vpop.f32.mrf.mxu0
    %797 = vmatprep.mubr.f32.mxu0 0.0
    %798 = vmatmul.mubr.f32.gmra.mxu0 %v664
    %v799 = vpop.f32.mrf.mxu0
    %v800 = vadd.f32 %v696, %v799
    %v801 = vpop.f32.mrf.mxu0
    %802 = vmatprep.mubr.f32.mxu0 0.0
    %803 = vmatmul.mubr.f32.gmra.mxu0 %v665
    %v804 = vpop.f32.mrf.mxu0
    %v805 = vadd.f32 %v696, %v804
    %v806 = vpop.f32.mrf.mxu0
    %807 = vmatprep.mubr.f32.mxu0 0.0
    %808 = vmatmul.mubr.f32.gmra.mxu0 %v666
    %v809 = vpop.f32.mrf.mxu0
    %v810 = vadd.f32 %v696, %v809
    %v811 = vpop.f32.mrf.mxu0
    %812 = vmatprep.mubr.f32.mxu0 0.0
    %813 = vmatmul.mubr.f32.gmra.mxu0 %v667
    %v814 = vpop.f32.mrf.mxu0
    %v815 = vadd.f32 %v696, %v814
    %v816 = vpop.f32.mrf.mxu0
    %817 = vmatprep.mubr.f32.mxu0 0.0
    %818 = vmatmul.mubr.f32.gmra.mxu0 %v668
    %v819 = vpop.f32.mrf.mxu0
    %v820 = vadd.f32 %v696, %v819
    %v821 = vpop.f32.mrf.mxu0
    %822 = vmatprep.mubr.f32.mxu0 0.0
    %823 = vmatmul.mubr.f32.gmra.mxu0 %v669
    %v824 = vpop.f32.mrf.mxu0
    %v825 = vadd.f32 %v696, %v824
    %v826 = vpop.f32.mrf.mxu0
    %827 = vmatprep.mubr.f32.mxu0 0.0
    %828 = vmatmul.mubr.f32.gmra.mxu0 %v670
    %v829 = vpop.f32.mrf.mxu0
    %v830 = vadd.f32 %v696, %v829
    %v831 = vpop.f32.mrf.mxu0
    %832 = vmatprep.mubr.f32.mxu0 0.0
    %833 = vmatmul.mubr.f32.gmra.mxu0 %v671
    %v834 = vpop.f32.mrf.mxu0
    %v835 = vadd.f32 %v696, %v834
    %v836 = vpop.f32.mrf.mxu0
    %837 = vmatprep.mubr.f32.mxu0 0.0
    %838 = vmatmul.mubr.f32.gmra.mxu0 %v672
    %v839 = vpop.f32.mrf.mxu0
    %v840 = vadd.f32 %v696, %v839
    %v841 = vpop.f32.mrf.mxu0
    %842 = vdwg.mxu0
    %v843 = vlaneseq
    %v844 = vand.u32 %v843, 127
    %vm845 = vcmp.ge.s32.totalorder %v844, 16
    %v846 = vtanh.pop %v765
    %v847 = vtanh.pop %v770
    %v848 = vtanh.pop %v775
    %v849 = vtanh.pop %v780
    %v850 = vtanh.pop %v785
    %v851 = vtanh.pop %v790
    %v852 = vtanh.pop %v795
    %v853 = vtanh.pop %v800
    %v854 = vtanh.pop %v805
    %v855 = vtanh.pop %v810
    %v856 = vtanh.pop %v815
    %v857 = vtanh.pop %v820
    %v858 = vtanh.pop %v825
    %v859 = vtanh.pop %v830
    %v860 = vtanh.pop %v835
    %v861 = vtanh.pop %v840
    %v862 = vsel %vm845, %v846, %v765
    %v863 = vsel %vm845, %v847, %v770
    %v864 = vsel %vm845, %v848, %v775
    %v865 = vsel %vm845, %v849, %v780
    %v866 = vsel %vm845, %v850, %v785
    %v867 = vsel %vm845, %v851, %v790
    %v868 = vsel %vm845, %v852, %v795
    %v869 = vsel %vm845, %v853, %v800
    %v870 = vsel %vm845, %v854, %v805
    %v871 = vsel %vm845, %v855, %v810
    %v872 = vsel %vm845, %v856, %v815
    %v873 = vsel %vm845, %v857, %v820
    %v874 = vsel %vm845, %v858, %v825
    %v875 = vsel %vm845, %v859, %v830
    %v876 = vsel %vm845, %v860, %v835
    %v877 = vsel %vm845, %v861, %v840
    %878 = vst [vmem:[%s3] sm:$0xff] %v862
    %879 = vst [vmem:[%s3 + $0x8] sm:$0xff] %v863
    %880 = vst [vmem:[%s3 + $0x10] sm:$0xff] %v864
    %881 = vst [vmem:[%s3 + $0x18] sm:$0xff] %v865
    %882 = vst [vmem:[%s3 + $0x20] sm:$0xff] %v866
    %883 = vst [vmem:[%s3 + $0x28] sm:$0xff] %v867
    %884 = vst [vmem:[%s3 + $0x30] sm:$0xff] %v868
    %885 = vst [vmem:[%s3 + $0x38] sm:$0xff] %v869
    %886 = vst [vmem:[%s3 + $0x40] sm:$0xff] %v870
    %887 = vst [vmem:[%s3 + $0x48] sm:$0xff] %v871
    %888 = vst [vmem:[%s3 + $0x50] sm:$0xff] %v872
    %889 = vst [vmem:[%s3 + $0x58] sm:$0xff] %v873
    %890 = vst [vmem:[%s3 + $0x60] sm:$0xff] %v874
    %891 = vst [vmem:[%s3 + $0x68] sm:$0xff] %v875
    %892 = vst [vmem:[%s3 + $0x70] sm:$0xff] %v876
    %893 = vst [vmem:[%s3 + $0x78] sm:$0xff] %v877
    // Predicated region
    $region18: #{state_model_fnn_policy_batched.1} parent=1 // pred_check
      _
    $region19: #{state_model_fnn_policy_batched.1} parent=1 // pred_check_branch
      %895 = sbr.rel (0) target = $region21
    $region20: #{state_model_fnn_policy_batched.1} parent=1 // pred_region
      _
    $region21: #{state_model_fnn_policy_batched.1} parent=1 // pred_fallthru
      _
    // Predicated region
    $region22: #{state_model_fnn_policy_batched.1} parent=1 // pred_check
      _
    $region23: #{state_model_fnn_policy_batched.1} parent=1 // pred_check_branch
      %897 = sbr.rel (0) target = $region25
    $region24: #{state_model_fnn_policy_batched.1} parent=1 // pred_region
      _
    $region25: #{state_model_fnn_policy_batched.1} parent=1 // pred_fallthru
      _
    %898 = vsyncpa [#allocation3], 1

</llo_original>
